<compile_context>
chip_gen: v7x
topology: tpu7x:2x2x1
jax: 0.10.0
libtpu: 0.0.40
codegen_flags: <defaults>
</compile_context>

<pallas_src>
import functools

import jax
import jax.numpy as jnp
from jax.experimental import pallas as pl
from jax.experimental.pallas import tpu as pltpu


def _round_up(a, b):
    return (a + b - 1) // b * b


def _cln_kernel(x_ref, mem_ref, w1_ref, b1_ref, w2_ref, b2_ref, o_ref,
                *, eps, d_model):
    # LayerNorm statistics in f32 regardless of input dtype.
    x = x_ref[...].astype(jnp.float32)          # (tr, D)
    mem = mem_ref[...]                          # (tr, M), bf16 (cast in wrapper)

    # Fused first layer of mlp_gamma / mlp_beta: (tr, M) @ (M, 2D), bf16 in, f32 acc.
    h = jnp.dot(mem, w1_ref[...], preferred_element_type=jnp.float32)
    h = jnp.maximum(h + b1_ref[...], 0.0)       # bias broadcast (1, 2D) -> (tr, 2D)

    # Fused second layer: block-diagonal (2D, 2D); gamma/beta folded into bias.
    gb = jnp.dot(h.astype(jnp.bfloat16), w2_ref[...],
                 preferred_element_type=jnp.float32) + b2_ref[...]
    gamma_hat = gb[:, :d_model]                 # gamma + delta_gamma
    beta_hat = gb[:, d_model:]                  # beta  + delta_beta

    d = x.shape[-1]
    mean = jnp.sum(x, axis=-1, keepdims=True) * (1.0 / d)
    xc = x - mean
    # torch.std defaults to the unbiased estimator (divide by D-1), eps added to std.
    var = jnp.sum(xc * xc, axis=-1, keepdims=True) * (1.0 / (d - 1))
    inv = pl.reciprocal(jnp.sqrt(var) + eps, approx=True)   # (tr, 1) on the EUP

    o_ref[...] = (gamma_hat * xc * inv + beta_hat).astype(o_ref.dtype)


def conditional_layer_norm(x, memory, params, *, eps=1e-6, block_rows=256):
    """x: (B, S, D); memory: (B, S, M) with M = rm_num_slots * rm_d_model."""
    B, S, D = x.shape
    M = memory.shape[-1]
    T = B * S
    twoD = 2 * D
    assert block_rows % 8 == 0

    # ---- parameter fusion (cheap; could be hoisted and done once per model) ----
    w1 = jnp.concatenate([params["w1_g"], params["w1_b"]], axis=1).astype(jnp.bfloat16)  # (M, 2D)
    b1 = jnp.concatenate([params["b1_g"], params["b1_b"]], axis=1).astype(jnp.float32)   # (1, 2D)
    zeros = jnp.zeros((D, D), params["w2_g"].dtype)
    w2 = jnp.concatenate(
        [jnp.concatenate([params["w2_g"], zeros], axis=1),
         jnp.concatenate([zeros, params["w2_b"]], axis=1)],
        axis=0).astype(jnp.bfloat16)                                                      # (2D, 2D)
    b2 = jnp.concatenate([params["b2_g"] + params["gamma"],
                          params["b2_b"] + params["beta"]], axis=1).astype(jnp.float32)   # (1, 2D)

    # ---- flatten rows, cast memory to bf16 (halves its HBM traffic), pad rows ----
    x2 = x.reshape(T, D)
    m2 = memory.reshape(T, M).astype(jnp.bfloat16)

    br = min(block_rows, _round_up(T, 8))   # don't over-tile tiny inputs
    Tp = _round_up(T, br)
    if Tp != T:
        x2 = jnp.pad(x2, ((0, Tp - T), (0, 0)))
        m2 = jnp.pad(m2, ((0, Tp - T), (0, 0)))

    # ---- explicit VMEM budget (v7x has only 64 MiB / TC) ----
    vmem_bytes = (
        2 * br * D * x.dtype.itemsize        # x tile, double-buffered
        + 2 * br * M * 2                     # memory tile (bf16), double-buffered
        + 2 * br * D * x.dtype.itemsize      # out tile, double-buffered
        + 2 * (M * twoD + twoD * twoD) * 2   # bf16 weights
        + 4 * twoD * 4                       # biases
        + 4 * br * twoD * 4                  # in-kernel temporaries (h, gb)
    )
    vmem_limit = int(min(64 * 1024 * 1024,
                         max(32 * 1024 * 1024, 2 * vmem_bytes + (8 << 20))))

    row = lambda i: (i, 0)
    full = lambda i: (0, 0)

    kernel = functools.partial(_cln_kernel, eps=eps, d_model=D)
    out = pl.pallas_call(
        kernel,
        out_shape=jax.ShapeDtypeStruct((Tp, D), x.dtype),
        grid_spec=pltpu.PrefetchScalarGridSpec(
            num_scalar_prefetch=0,
            grid=(Tp // br,),
            in_specs=[
                pl.BlockSpec((br, D), row),        # x
                pl.BlockSpec((br, M), row),        # memory (bf16)
                pl.BlockSpec((M, twoD), full),     # fused first-layer weight
                pl.BlockSpec((1, twoD), full),     # fused first-layer bias
                pl.BlockSpec((twoD, twoD), full),  # block-diag second-layer weight
                pl.BlockSpec((1, twoD), full),     # second-layer bias (+gamma/beta)
            ],
            out_specs=pl.BlockSpec((br, D), row),
        ),
        compiler_params=pltpu.CompilerParams(
            dimension_semantics=("parallel",),
            vmem_limit_bytes=vmem_limit),
    )(x2, m2, w1, b1, w2, b2)

    return out[:T].reshape(B, S, D)


def _xavier_uniform(key, fan_in, fan_out, dtype=jnp.float32):
    # Matches nn.init.xavier_uniform_ on a torch (out, in) weight; stored (in, out).
    limit = (6.0 / (fan_in + fan_out)) ** 0.5
    return jax.random.uniform(key, (fan_in, fan_out), dtype, -limit, limit)


def init_params(key, d_model, rm_num_slots, rm_d_model):
    assert d_model == rm_d_model, "module requires d_model == rm_d_model"
    M = rm_num_slots * rm_d_model
    D = d_model
    k1, k2, k3, k4 = jax.random.split(key, 4)
    bias = lambda n: jnp.full((1, n), 0.1, jnp.float32)   # nn.init.constant_(bias, 0.1)
    return {
        "w1_g": _xavier_uniform(k1, M, D), "b1_g": bias(D),
        "w2_g": _xavier_uniform(k2, D, D), "b2_g": bias(D),   # Linear(rm_d_model, rm_d_model)
        "w1_b": _xavier_uniform(k3, M, D), "b1_b": bias(D),
        "w2_b": _xavier_uniform(k4, D, D), "b2_b": bias(D),
        "gamma": jnp.ones((1, D), jnp.float32),
        "beta": jnp.zeros((1, D), jnp.float32),
    }


def _reference(x, memory, params, eps=1e-6):
    B, S, D = x.shape
    m = memory.reshape(B * S, -1)
    dg = jnp.maximum(m @ params["w1_g"] + params["b1_g"], 0.0) @ params["w2_g"] + params["b2_g"]
    db = jnp.maximum(m @ params["w1_b"] + params["b1_b"], 0.0) @ params["w2_b"] + params["b2_b"]
    dg = dg.reshape(B, S, D)
    db = db.reshape(B, S, D)
    mean = x.mean(-1, keepdims=True)
    std = jnp.sqrt(((x - mean) ** 2).sum(-1, keepdims=True) / (D - 1))
    gamma_hat = params["gamma"][0] + dg
    beta_hat = params["beta"][0] + db
    return gamma_hat * (x - mean) / (std + eps) + beta_hat


if __name__ == "__main__":
    d_model = 32
    rm_d_model = 32
    rm_num_slots = 3
    B, S = 2, 8

    key = jax.random.PRNGKey(0)
    kx, km, kp = jax.random.split(key, 3)
    x = jax.random.normal(kx, (B, S, d_model), jnp.float32)
    memory = jax.random.normal(km, (B, S, rm_num_slots * rm_d_model), jnp.float32)
    params = init_params(kp, d_model, rm_num_slots, rm_d_model)

    out = conditional_layer_norm(x, memory, params)
    out = jax.block_until_ready(out)

    ref = _reference(x, memory, params)
    assert out.shape == (B, S, d_model)
    # bf16 matmul inputs + approx reciprocal => slightly looser tolerance vs f32 ref.
    assert jnp.allclose(out, ref, rtol=3e-2, atol=3e-2), "mismatch vs reference"
    print("KERNEL_OK")
</pallas_src>

<mosaic_0001>
module attributes {stable_mosaic.version = 11 : i64} {
  func.func @_cln_kernel(%arg0: i32, %arg1: memref<16x32xf32, #tpu.memory_space<vmem>>, %arg2: memref<16x96xbf16, #tpu.memory_space<vmem>>, %arg3: memref<96x64xbf16, #tpu.memory_space<vmem>>, %arg4: memref<1x64xf32, #tpu.memory_space<vmem>>, %arg5: memref<64x64xbf16, #tpu.memory_space<vmem>>, %arg6: memref<1x64xf32, #tpu.memory_space<vmem>>, %arg7: memref<16x32xf32, #tpu.memory_space<vmem>>) attributes {dimension_semantics = [#tpu.dimension_semantics<parallel>], iteration_bounds = array<i64: 1>, scalar_prefetch = 0 : i64, scratch_operands = 0 : i64, tpu.core_type = #tpu.core_type<tc>, window_params = [{transform_indices = @transform_0, window_bounds = array<i64: 16, 32>}, {transform_indices = @transform_1, window_bounds = array<i64: 16, 96>}, {pipeline_mode = #tpu.pipeline_mode<synchronous>, transform_indices = @transform_2, window_bounds = array<i64: 96, 64>}, {pipeline_mode = #tpu.pipeline_mode<synchronous>, transform_indices = @transform_3, window_bounds = array<i64: 1, 64>}, {pipeline_mode = #tpu.pipeline_mode<synchronous>, transform_indices = @transform_4, window_bounds = array<i64: 64, 64>}, {pipeline_mode = #tpu.pipeline_mode<synchronous>, transform_indices = @transform_5, window_bounds = array<i64: 1, 64>}, {transform_indices = @transform_6, window_bounds = array<i64: 16, 32>}]} {
    %c0 = arith.constant 0 : index
    %c0_0 = arith.constant 0 : index
    %0 = vector.load %arg1[%c0, %c0_0] : memref<16x32xf32, #tpu.memory_space<vmem>>, vector<16x32xf32>
    %c0_1 = arith.constant 0 : index
    %c0_2 = arith.constant 0 : index
    %1 = vector.load %arg2[%c0_1, %c0_2] : memref<16x96xbf16, #tpu.memory_space<vmem>>, vector<16x96xbf16>
    %c0_3 = arith.constant 0 : index
    %c0_4 = arith.constant 0 : index
    %2 = vector.load %arg3[%c0_3, %c0_4] : memref<96x64xbf16, #tpu.memory_space<vmem>>, vector<96x64xbf16>
    %cst = arith.constant dense<0.000000e+00> : vector<16x64xf32>
    %3 = tpu.matmul %1, %2, %cst {dimension_numbers = #tpu.dot_dimension_numbers<[1], [0], [0], [1], [0, 0, 1, 1], [], []>} : vector<16x96xbf16>, vector<96x64xbf16>, vector<16x64xf32> -> vector<16x64xf32>
    %c0_5 = arith.constant 0 : index
    %c0_6 = arith.constant 0 : index
    %4 = vector.load %arg4[%c0_5, %c0_6] : memref<1x64xf32, #tpu.memory_space<vmem>>, vector<1x64xf32>
    %5 = vector.broadcast %4 : vector<1x64xf32> to vector<16x64xf32>
    %6 = arith.addf %3, %5 : vector<16x64xf32>
    %cst_7 = arith.constant 0.000000e+00 : f32
    %7 = vector.broadcast %cst_7 : f32 to vector<16x64xf32>
    %8 = arith.maximumf %6, %7 : vector<16x64xf32>
    %9 = arith.truncf %8 : vector<16x64xf32> to vector<16x64xbf16>
    %c0_8 = arith.constant 0 : index
    %c0_9 = arith.constant 0 : index
    %10 = vector.load %arg5[%c0_8, %c0_9] : memref<64x64xbf16, #tpu.memory_space<vmem>>, vector<64x64xbf16>
    %cst_10 = arith.constant dense<0.000000e+00> : vector<16x64xf32>
    %11 = tpu.matmul %9, %10, %cst_10 {dimension_numbers = #tpu.dot_dimension_numbers<[1], [0], [0], [1], [0, 0, 1, 1], [], []>} : vector<16x64xbf16>, vector<64x64xbf16>, vector<16x64xf32> -> vector<16x64xf32>
    %c0_11 = arith.constant 0 : index
    %c0_12 = arith.constant 0 : index
    %12 = vector.load %arg6[%c0_11, %c0_12] : memref<1x64xf32, #tpu.memory_space<vmem>>, vector<1x64xf32>
    %13 = vector.broadcast %12 : vector<1x64xf32> to vector<16x64xf32>
    %14 = arith.addf %11, %13 : vector<16x64xf32>
    %15 = vector.extract_strided_slice %14 {offsets = [0, 0], sizes = [16, 32], strides = [1, 1]} : vector<16x64xf32> to vector<16x32xf32>
    %16 = vector.extract_strided_slice %14 {offsets = [0, 32], sizes = [16, 32], strides = [1, 1]} : vector<16x64xf32> to vector<16x32xf32>
    %cst_13 = arith.constant dense<0.000000e+00> : vector<16xf32>
    %17 = vector.multi_reduction <add>, %0, %cst_13 [1] : vector<16x32xf32> to vector<16xf32>
    %18 = vector.shape_cast %17 : vector<16xf32> to vector<16x1xf32>
    %cst_14 = arith.constant 3.125000e-02 : f32
    %19 = vector.broadcast %cst_14 : f32 to vector<16x1xf32>
    %20 = arith.mulf %18, %19 : vector<16x1xf32>
    %21 = vector.broadcast %20 : vector<16x1xf32> to vector<16x32xf32>
    %22 = arith.subf %0, %21 : vector<16x32xf32>
    %23 = arith.mulf %22, %22 : vector<16x32xf32>
    %cst_15 = arith.constant dense<0.000000e+00> : vector<16xf32>
    %24 = vector.multi_reduction <add>, %23, %cst_15 [1] : vector<16x32xf32> to vector<16xf32>
    %25 = vector.shape_cast %24 : vector<16xf32> to vector<16x1xf32>
    %cst_16 = arith.constant 0.0322580636 : f32
    %26 = vector.broadcast %cst_16 : f32 to vector<16x1xf32>
    %27 = arith.mulf %25, %26 : vector<16x1xf32>
    %28 = math.sqrt %27 : vector<16x1xf32>
    %cst_17 = arith.constant 9.99999997E-7 : f32
    %29 = vector.broadcast %cst_17 : f32 to vector<16x1xf32>
    %30 = arith.addf %28, %29 : vector<16x1xf32>
    %31 = tpu.reciprocal %30 {approx = true} : vector<16x1xf32> -> vector<16x1xf32>
    %32 = arith.mulf %15, %22 : vector<16x32xf32>
    %33 = vector.broadcast %31 : vector<16x1xf32> to vector<16x32xf32>
    %34 = arith.mulf %32, %33 : vector<16x32xf32>
    %35 = arith.addf %34, %16 : vector<16x32xf32>
    %c0_18 = arith.constant 0 : index
    %c0_19 = arith.constant 0 : index
    %36 = vector.load %arg7[%c0_18, %c0_19] : memref<16x32xf32, #tpu.memory_space<vmem>>, vector<16x32xf32>
    tpu.vector_store %arg7[%c0_18, %c0_19], %35 {strides = array<i32>} : memref<16x32xf32, #tpu.memory_space<vmem>>, vector<16x32xf32>,
    return
  }
  func.func @transform_0(%arg0: i32) -> (i32, i32) {
    %c0_i32 = arith.constant 0 : i32
    %c0_i32_0 = arith.constant 0 : i32
    return %arg0, %c0_i32 : i32, i32
  }
  func.func @transform_1(%arg0: i32) -> (i32, i32) {
    %c0_i32 = arith.constant 0 : i32
    %c0_i32_0 = arith.constant 0 : i32
    return %arg0, %c0_i32 : i32, i32
  }
  func.func @transform_2(%arg0: i32) -> (i32, i32) {
    %c0_i32 = arith.constant 0 : i32
    %c0_i32_0 = arith.constant 0 : i32
    %c0_i32_1 = arith.constant 0 : i32
    return %c0_i32, %c0_i32_0 : i32, i32
  }
  func.func @transform_3(%arg0: i32) -> (i32, i32) {
    %c0_i32 = arith.constant 0 : i32
    %c0_i32_0 = arith.constant 0 : i32
    %c0_i32_1 = arith.constant 0 : i32
    return %c0_i32, %c0_i32_0 : i32, i32
  }
  func.func @transform_4(%arg0: i32) -> (i32, i32) {
    %c0_i32 = arith.constant 0 : i32
    %c0_i32_0 = arith.constant 0 : i32
    %c0_i32_1 = arith.constant 0 : i32
    return %c0_i32, %c0_i32_0 : i32, i32
  }
  func.func @transform_5(%arg0: i32) -> (i32, i32) {
    %c0_i32 = arith.constant 0 : i32
    %c0_i32_0 = arith.constant 0 : i32
    %c0_i32_1 = arith.constant 0 : i32
    return %c0_i32, %c0_i32_0 : i32, i32
  }
  func.func @transform_6(%arg0: i32) -> (i32, i32) {
    %c0_i32 = arith.constant 0 : i32
    %c0_i32_0 = arith.constant 0 : i32
    return %arg0, %c0_i32 : i32, i32
  }
}

</mosaic_0001>

<llo_original>
// kernel: tpu_custom_call.1
$region0: #{tpu_custom_call.1}
  #allocation0 [shape = 'u32[]', space=smem, size = 0x4, offset = 0x4, fixed_abs, tag = 'smem constant byte address 0x4 - core index']
  #allocation1 [shape = 'u32[144,128]{1,0:T(1,128)}', space=vmem, size = 0x12000, scoped, tag = 'internal scratch']
  %s0 = inlined_call_operand.vmem [shape: f32[16,32], index: 0, kind: input, shape index: {}]
  %s1 = inlined_call_operand.vmem [shape: bf16[16,96], index: 1, kind: input, shape index: {}]
  %s2 = inlined_call_operand.vmem [shape: bf16[96,64], index: 2, kind: input, shape index: {}]
  %s3 = inlined_call_operand.vmem [shape: f32[1,64], index: 3, kind: input, shape index: {}]
  %s4 = inlined_call_operand.vmem [shape: bf16[64,64], index: 4, kind: input, shape index: {}]
  %s5 = inlined_call_operand.vmem [shape: f32[1,64], index: 5, kind: input, shape index: {}]
  %s6 = inlined_call_operand.hbm [shape: f32[16,32], index: 6, kind: output, shape index: {}]
  %s7 = sld [smem:[#allocation0]]
  $region34: #{tpu_custom_call.1} parent=0
    _
  %s9 = ssub.s32 1, %s7
  %s10 = scalar_select 0, %s9, %s7
  $region1: #{tpu_custom_call.1} parent=0
    #allocation2 [shape = 'u8[8192]{0}', space=vmem, size = 0x2000, scoped, tag = 'output window, operand 0, single buffered']
    #allocation3 [shape = 's32[1]{0}', space=sflag, size = 0x4, scoped, tag = 'scoped memory for tpu_custom_call.1']
    %11 = vsyncpa [#allocation3], 0
    // Predicated region
    $region2: #{tpu_custom_call.1} parent=1 // pred_check
      _
    $region3: #{tpu_custom_call.1} parent=1 // pred_check_branch
      %13 = sbr.rel (0) target = $region5
    $region4: #{tpu_custom_call.1} parent=1 // pred_region
      _
    $region5: #{tpu_custom_call.1} parent=1 // pred_fallthru
      _
    // Predicated region
    $region6: #{tpu_custom_call.1} parent=1 // pred_check
      _
    $region7: #{tpu_custom_call.1} parent=1 // pred_check_branch
      %15 = sbr.rel (0) target = $region9
    $region8: #{tpu_custom_call.1} parent=1 // pred_region
      _
    $region9: #{tpu_custom_call.1} parent=1 // pred_fallthru
      _
    // Predicated region
    $region10: #{tpu_custom_call.1} parent=1 // pred_check
      _
    $region11: #{tpu_custom_call.1} parent=1 // pred_check_branch
      %17 = sbr.rel (0) target = $region13
    $region12: #{tpu_custom_call.1} parent=1 // pred_region
      _
    $region13: #{tpu_custom_call.1} parent=1 // pred_fallthru
      _
    // Predicated region
    $region14: #{tpu_custom_call.1} parent=1 // pred_check
      _
    $region15: #{tpu_custom_call.1} parent=1 // pred_check_branch
      %19 = sbr.rel (0) target = $region17
    $region16: #{tpu_custom_call.1} parent=1 // pred_region
      _
    $region17: #{tpu_custom_call.1} parent=1 // pred_fallthru
      _
    // Predicated region
    $region18: #{tpu_custom_call.1} parent=1 // pred_check
      _
    $region19: #{tpu_custom_call.1} parent=1 // pred_check_branch
      %21 = sbr.rel (0) target = $region21
    $region20: #{tpu_custom_call.1} parent=1 // pred_region
      _
    $region21: #{tpu_custom_call.1} parent=1 // pred_fallthru
      _
    // Predicated region
    $region22: #{tpu_custom_call.1} parent=1 // pred_check
      _
    $region23: #{tpu_custom_call.1} parent=1 // pred_check_branch
      %23 = sbr.rel (0) target = $region25
    $region24: #{tpu_custom_call.1} parent=1 // pred_region
      _
    $region25: #{tpu_custom_call.1} parent=1 // pred_fallthru
      _
    %v25 = vld [vmem:[%s0] sm:$0xff]
    %v26 = vld [vmem:[%s0 + $0x8] sm:$0xff]
    %v27 = vld [vmem:[%s1] sm:$0xf]
    %v28 = vld [vmem:[%s1 + $0x4] sm:$0xf]
    %v29 = vld [vmem:[%s2] sm:$0xf]
    %v30 = vld [vmem:[%s2 + $0x4] sm:$0xf]
    %v31 = vld [vmem:[%s2 + $0x8] sm:$0xf]
    %v32 = vld [vmem:[%s2 + $0xc] sm:$0xf]
    %v33 = vld [vmem:[%s2 + $0x10] sm:$0xf]
    %v34 = vld [vmem:[%s2 + $0x14] sm:$0xf]
    %v35 = vld [vmem:[%s2 + $0x18] sm:$0xf]
    %v36 = vld [vmem:[%s2 + $0x1c] sm:$0xf]
    %v37 = vld [vmem:[%s2 + $0x20] sm:$0xf]
    %v38 = vld [vmem:[%s2 + $0x24] sm:$0xf]
    %v39 = vld [vmem:[%s2 + $0x28] sm:$0xf]
    %v40 = vld [vmem:[%s2 + $0x2c] sm:$0xf]
    %v41 = vld [vmem:[%s3] sm:$0x1]
    %v43 = vlaneseq
    %v44 = vshrl.u32 %v43, 7
    %v45 = vsub.s32 0, %v44
    %v46 = vrot.slane %v41, %v45
    %v50 = vunpack.c.l.b16 %v27
    %v51 = vunpack.c.l.b16 %v28
    %v52 = vpack.c.b16 %v51, %v50
    %v65 = vunpack.c.l.b16 %v29
    %v66 = vunpack.c.l.b16 %v30
    %v67 = vunpack.c.l.b16 %v31
    %v68 = vunpack.c.l.b16 %v32
    %v69 = vunpack.c.l.b16 %v33
    %v70 = vunpack.c.l.b16 %v34
    %v71 = vunpack.c.l.b16 %v35
    %v72 = vunpack.c.l.b16 %v36
    %v73 = vunpack.c.l.b16 %v37
    %v74 = vunpack.c.l.b16 %v38
    %v75 = vunpack.c.l.b16 %v39
    %v76 = vunpack.c.l.b16 %v40
    %v77 = vpack.c.b16 %v66, %v65
    %v78 = vpack.c.b16 %v68, %v67
    %v79 = vpack.c.b16 %v70, %v69
    %v80 = vpack.c.b16 %v72, %v71
    %v81 = vpack.c.b16 %v74, %v73
    %v82 = vpack.c.b16 %v76, %v75
    %vm89 = vcmask 785408
    %v91 = vsel %vm89, %v52, 0
    %93 = vmatprep.subr.bf16.mxu0 0
    %94 = vmatpush1.bf16.msra.mxu0 %v77
    %95 = vmatprep.subr.bf16.mxu0 0
    %96 = vmatpush1.bf16.msra.mxu0 %v78
    %97 = vmatprep.subr.bf16.mxu0 0
    %98 = vmatpush1.bf16.msra.mxu0 %v79
    %99 = vmatprep.subr.bf16.mxu0 0
    %100 = vmatpush1.bf16.msra.mxu0 %v80
    %101 = vmatprep.subr.bf16.mxu0 0
    %102 = vmatpush1.bf16.msra.mxu0 %v81
    %103 = vmatprep.subr.bf16.mxu0 0
    %104 = vmatpush1.bf16.msra.mxu0 %v82
    %105 = vmatprep.subr.bf16.mxu0 0
    %106 = vmatpush1.bf16.msra.mxu0 0
    %107 = vmatprep.subr.bf16.mxu0 0
    %108 = vmatpush1.bf16.msra.mxu0 0
    %109 = vmatprep.subr.bf16.mxu0 0
    %110 = vmatpush1.bf16.msra.mxu0 0
    %111 = vmatprep.subr.bf16.mxu0 0
    %112 = vmatpush1.bf16.msra.mxu0 0
    %113 = vmatprep.subr.bf16.mxu0 0
    %114 = vmatpush1.bf16.msra.mxu0 0
    %115 = vmatprep.subr.bf16.mxu0 0
    %116 = vmatpush1.bf16.msra.mxu0 0
    %117 = vmatprep.subr.bf16.mxu0 0
    %118 = vmatpush1.bf16.msra.mxu0 0
    %119 = vmatprep.subr.bf16.mxu0 0
    %120 = vmatpush1.bf16.msra.mxu0 0
    %121 = vmatprep.subr.bf16.mxu0 0
    %122 = vmatpush1.bf16.msra.mxu0 0
    %123 = vmatprep.subr.bf16.mxu0 0
    %124 = vmatpush1.bf16.msra.mxu0 0
    %125 = vmatprep.mubr.bf16.mxu0 0
    %126 = vmatmul.mubr.bf16.gmra.mrb[0].mxu0 %v91
    %v127 = vpop.f32.mrb[0].mxu0
    %v128 = vadd.f32 %v46, %v127
    %v129 = vpop.f32.mrb[0].mxu0
    %v130 = vpop.f32.mrb[0].mxu0
    %v131 = vadd.f32 %v46, %v130
    %v132 = vpop.f32.mrb[0].mxu0
    %133 = vdwg.mxu0
    %v134 = vmax.f32 %v128, 0.0
    %v135 = vmax.f32 %v131, 0.0
    %v136 = vpack.c.bf16 %v135, %v134
    %v137 = vld [vmem:[%s4] sm:$0xf]
    %v138 = vld [vmem:[%s4 + $0x4] sm:$0xf]
    %v139 = vld [vmem:[%s4 + $0x8] sm:$0xf]
    %v140 = vld [vmem:[%s4 + $0xc] sm:$0xf]
    %v141 = vld [vmem:[%s4 + $0x10] sm:$0xf]
    %v142 = vld [vmem:[%s4 + $0x14] sm:$0xf]
    %v143 = vld [vmem:[%s4 + $0x18] sm:$0xf]
    %v144 = vld [vmem:[%s4 + $0x1c] sm:$0xf]
    %v145 = vld [vmem:[%s5] sm:$0x1]
    %v147 = vlaneseq
    %v148 = vshrl.u32 %v147, 7
    %v149 = vsub.s32 0, %v148
    %v150 = vrot.slane %v145, %v149
    %v160 = vunpack.c.l.b16 %v137
    %v161 = vunpack.c.l.b16 %v138
    %v162 = vunpack.c.l.b16 %v139
    %v163 = vunpack.c.l.b16 %v140
    %v164 = vunpack.c.l.b16 %v141
    %v165 = vunpack.c.l.b16 %v142
    %v166 = vunpack.c.l.b16 %v143
    %v167 = vunpack.c.l.b16 %v144
    %v168 = vpack.c.b16 %v161, %v160
    %v169 = vpack.c.b16 %v163, %v162
    %v170 = vpack.c.b16 %v165, %v164
    %v171 = vpack.c.b16 %v167, %v166
    %vm176 = vcmask 523264
    %v178 = vsel %vm176, %v136, 0
    %180 = vmatprep.subr.bf16.mxu0 0
    %181 = vmatpush1.bf16.msra.mxu0 %v168
    %182 = vmatprep.subr.bf16.mxu0 0
    %183 = vmatpush1.bf16.msra.mxu0 %v169
    %184 = vmatprep.subr.bf16.mxu0 0
    %185 = vmatpush1.bf16.msra.mxu0 %v170
    %186 = vmatprep.subr.bf16.mxu0 0
    %187 = vmatpush1.bf16.msra.mxu0 %v171
    %188 = vmatprep.subr.bf16.mxu0 0
    %189 = vmatpush1.bf16.msra.mxu0 0
    %190 = vmatprep.subr.bf16.mxu0 0
    %191 = vmatpush1.bf16.msra.mxu0 0
    %192 = vmatprep.subr.bf16.mxu0 0
    %193 = vmatpush1.bf16.msra.mxu0 0
    %194 = vmatprep.subr.bf16.mxu0 0
    %195 = vmatpush1.bf16.msra.mxu0 0
    %196 = vmatprep.subr.bf16.mxu0 0
    %197 = vmatpush1.bf16.msra.mxu0 0
    %198 = vmatprep.subr.bf16.mxu0 0
    %199 = vmatpush1.bf16.msra.mxu0 0
    %200 = vmatprep.subr.bf16.mxu0 0
    %201 = vmatpush1.bf16.msra.mxu0 0
    %202 = vmatprep.subr.bf16.mxu0 0
    %203 = vmatpush1.bf16.msra.mxu0 0
    %204 = vmatprep.subr.bf16.mxu0 0
    %205 = vmatpush1.bf16.msra.mxu0 0
    %206 = vmatprep.subr.bf16.mxu0 0
    %207 = vmatpush1.bf16.msra.mxu0 0
    %208 = vmatprep.subr.bf16.mxu0 0
    %209 = vmatpush1.bf16.msra.mxu0 0
    %210 = vmatprep.subr.bf16.mxu0 0
    %211 = vmatpush1.bf16.msra.mxu0 0
    %212 = vmatprep.mubr.bf16.mxu0 0
    %213 = vmatmul.mubr.bf16.gmra.mrb[0].mxu0 %v178
    %v214 = vpop.f32.mrb[0].mxu0
    %v215 = vadd.f32 %v150, %v214
    %v216 = vpop.f32.mrb[0].mxu0
    %v217 = vpop.f32.mrb[0].mxu0
    %v218 = vadd.f32 %v150, %v217
    %v219 = vpop.f32.mrb[0].mxu0
    %220 = vdwg.mxu0
    %vm221 = vcmask 261120
    %v222 = vsel %vm221, %v25, 0.0
    %223 = vadd.xlane.f32.xlu0 %v222
    %v224 = vpop.xlane.xlu0 %223
    %v225 = vsel %vm221, %v26, 0.0
    %226 = vadd.xlane.f32.xlu0 %v225
    %v227 = vpop.xlane.xlu0 %226
    %v228 = vmul.f32 %v224, 0.03125
    %v229 = vmul.f32 %v227, 0.03125
    %v230 = vsub.f32 %v25, %v228
    %v231 = vsub.f32 %v26, %v229
    %v232 = vmul.f32 %v230, %v230
    %v233 = vmul.f32 %v231, %v231
    %v234 = vsel %vm221, %v232, 0.0
    %235 = vadd.xlane.f32.xlu0 %v234
    %v236 = vpop.xlane.xlu0 %235
    %v237 = vsel %vm221, %v233, 0.0
    %238 = vadd.xlane.f32.xlu0 %v237
    %v239 = vpop.xlane.xlu0 %238
    %v240 = vmul.f32 %v236, 0.032258064
    %v241 = vmul.f32 %v239, 0.032258064
    %v242 = vrsqrt.pop %v240
    %v243 = vmul.f32 %v240, %v242
    %vm244 = vcmp.eq.f32.partialorder %v240, inf
    %v245 = vsel %vm244, %v240, %v243
    %vm246 = vcmp.eq.f32.partialorder %v240, 0.0
    %v247 = vand.u32 %v240, 2147483648
    %v248 = vsel %vm246, %v247, %v245
    %v249 = vrsqrt.pop %v241
    %v250 = vmul.f32 %v241, %v249
    %vm251 = vcmp.eq.f32.partialorder %v241, inf
    %v252 = vsel %vm251, %v241, %v250
    %vm253 = vcmp.eq.f32.partialorder %v241, 0.0
    %v254 = vand.u32 %v241, 2147483648
    %v255 = vsel %vm253, %v254, %v252
    %v256 = vadd.f32 %v248, 1e-06
    %v257 = vadd.f32 %v255, 1e-06
    %v258 = vrcp.pop %v256
    %v259 = vrcp.pop %v257
    %v260 = vmul.f32 %v215, %v230
    %v261 = vmul.f32 %v218, %v231
    %v262 = vmul.f32 %v260, %v258
    %v263 = vmul.f32 %v261, %v259
    %266 = vrot.lane.b32.xlu0 %v215, 96
    %v267 = vpop.permute.xlu0 %266
    %268 = vrot.lane.b32.xlu0 %v218, 96
    %v269 = vpop.permute.xlu0 %268
    %v272 = vadd.f32 %v262, %v267
    %v273 = vadd.f32 %v263, %v269
    %274 = vst.msk [vmem:[#allocation2] sm:$0xff] %vm221, %v272
    %275 = vst.msk [vmem:[#allocation2 + $0x8] sm:$0xff] %vm221, %v273
    // Predicated region
    $region26: #{tpu_custom_call.1} parent=1 // pred_check
      _
    $region27: #{tpu_custom_call.1} parent=1 // pred_check_branch
      %277 = sbr.rel (0) target = $region29
    $region28: #{tpu_custom_call.1} parent=1 // pred_region
      %s279 = ssub.s32 256, 256
      %280 = vsyncadd [#allocation3], %s279
      %s281 = sshll.u32 [#allocation2], 4
      %s282 = int_to_ptr.vmem [resolvable:$true] %s281
      %287 = dma.vmem_to_hbm [thread:$0]  %s282, 256, %s6, [#allocation3], 128, 128, 8
    $region29: #{tpu_custom_call.1} parent=1 // pred_fallthru
      _
    // Predicated region
    $region30: #{tpu_custom_call.1} parent=1 // pred_check
      _
    $region31: #{tpu_custom_call.1} parent=1 // pred_check_branch
      %289 = sbr.rel (0) target = $region33
    $region32: #{tpu_custom_call.1} parent=1 // pred_region
      %290 = dma.done [#allocation3], 256
    $region33: #{tpu_custom_call.1} parent=1 // pred_fallthru
      _
    %291 = vsyncpa [#allocation3], 1

</llo_original>
